<compile_context>
chip_gen: v7x
topology: tpu7x:2x2x1
jax: 0.10.0
libtpu: 0.0.40
codegen_flags: <defaults>
</compile_context>

<pallas_src>
import jax
import jax.numpy as jnp
from jax import lax
from jax.experimental import pallas as pl
from jax.experimental.pallas import tpu as pltpu


def _model_kernel(x3_ref, w1_ref, b1_ref, w2_ref, b2_ref, x4_ref, out_ref):
    # x3_ref: (N, H)      w1_ref: (H, H)  [torch (out,in)]   b1_ref: (1, H)
    # w2_ref: (C, H)      b2_ref: (1, C)
    # x4_ref: (B, S, C)   out_ref: (B, N, S)
    #
    # Every contraction is over the shared *last* dims via dot_general, so no
    # transposes are materialized anywhere (wrapper or kernel).
    dn = (((1,), (1,)), ((), ()))

    # v3 = x3 @ W1^T + b1
    v3 = lax.dot_general(x3_ref[...], w1_ref[...], dn,
                         preferred_element_type=jnp.float32) + b1_ref[...]

    # v4 = Dropout(v3) -> identity at inference.
    v4 = v3

    # v5 = v4 @ W2^T + b2      -> (N, C)
    v5 = lax.dot_general(v4, w2_ref[...], dn,
                         preferred_element_type=jnp.float32) + b2_ref[...]

    # v7[b] = v5 @ x4[b]^T     -> (N, S); emit (B, N, S) directly.
    B = x4_ref.shape[0]
    for b in range(B):  # tiny static unroll (B == 2)
        out_ref[b] = lax.dot_general(v5, x4_ref[b], dn,
                                     preferred_element_type=jnp.float32)


def model_forward(x3, x4, w1, b1, w2, b2):
    """x3: (N, H) f32, x4: (B, S, C) f32 -> (B, N, S) f32."""
    N, H = x3.shape
    B, S, C = x4.shape
    assert w1.shape == (H, H) and b1.shape == (H,)
    assert w2.shape == (C, H) and b2.shape == (C,)

    # Only metadata-level prep (no data movement): 2-D views of the biases.
    b1_2d = b1.reshape(1, H)
    b2_2d = b2.reshape(1, C)

    vmem = pltpu.MemorySpace.VMEM
    return pl.pallas_call(
        _model_kernel,
        out_shape=jax.ShapeDtypeStruct((B, N, S), jnp.float32),
        in_specs=[
            pl.BlockSpec(memory_space=vmem),   # x3
            pl.BlockSpec(memory_space=vmem),   # w1 (PyTorch layout)
            pl.BlockSpec(memory_space=vmem),   # b1
            pl.BlockSpec(memory_space=vmem),   # w2 (PyTorch layout)
            pl.BlockSpec(memory_space=vmem),   # b2
            pl.BlockSpec(memory_space=vmem),   # x4 (B, S, C)
        ],
        out_specs=pl.BlockSpec(memory_space=vmem),
    )(x3, w1, b1_2d, w2, b2_2d, x4)


def reference_forward(x3, x4, w1, b1, w2, b2):
    v3 = x3 @ w1.T + b1
    v5 = v3 @ w2.T + b2                       # (N, C)
    # torch.matmul(v5, x4.transpose(-2, -1)) -> (B, N, S)
    return jnp.einsum("nc,bsc->bns", v5, x4)


if __name__ == "__main__":
    # Small, self-consistent shapes implied by the forward pass:
    #   x3: (N, hidden), x4: (B, S, num_classes)
    N, H, C = 2, 32, 16          # hidden_size=32, num_classes=16
    B, S = 2, 128

    key = jax.random.PRNGKey(0)
    k1, k2, k3, k4, k5, k6 = jax.random.split(key, 6)

    # Deterministic parameter init (PyTorch Linear-style uniform bounds).
    lim1 = 1.0 / jnp.sqrt(H)
    lim2 = 1.0 / jnp.sqrt(H)
    w1 = jax.random.uniform(k1, (H, H), jnp.float32, -lim1, lim1)
    b1 = jax.random.uniform(k2, (H,), jnp.float32, -lim1, lim1)
    w2 = jax.random.uniform(k3, (C, H), jnp.float32, -lim2, lim2)
    b2 = jax.random.uniform(k4, (C,), jnp.float32, -lim2, lim2)

    x3 = jax.random.normal(k5, (N, H), jnp.float32)
    x4 = jax.random.normal(k6, (B, S, C), jnp.float32)

    out = model_forward(x3, x4, w1, b1, w2, b2)
    jax.block_until_ready(out)

    ref = reference_forward(x3, x4, w1, b1, w2, b2)
    assert out.shape == (B, N, S), out.shape
    assert jnp.allclose(out, ref, atol=1e-4, rtol=1e-4), "mismatch vs reference"

    print("KERNEL_OK")
</pallas_src>

<mosaic_0001>
module attributes {stable_mosaic.version = 11 : i64} {
  func.func @_model_kernel(%arg0: memref<2x32xf32, #tpu.memory_space<vmem>>, %arg1: memref<32x32xf32, #tpu.memory_space<vmem>>, %arg2: memref<1x32xf32, #tpu.memory_space<vmem>>, %arg3: memref<16x32xf32, #tpu.memory_space<vmem>>, %arg4: memref<1x16xf32, #tpu.memory_space<vmem>>, %arg5: memref<2x128x16xf32, #tpu.memory_space<vmem>>, %arg6: memref<2x2x128xf32, #tpu.memory_space<vmem>>) attributes {dimension_semantics = [], scalar_prefetch = 0 : i64, scratch_operands = 0 : i64, tpu.core_type = #tpu.core_type<tc>} {
    %c0 = arith.constant 0 : index
    %c0_0 = arith.constant 0 : index
    %0 = vector.load %arg0[%c0, %c0_0] : memref<2x32xf32, #tpu.memory_space<vmem>>, vector<2x32xf32>
    %c0_1 = arith.constant 0 : index
    %c0_2 = arith.constant 0 : index
    %1 = vector.load %arg1[%c0_1, %c0_2] : memref<32x32xf32, #tpu.memory_space<vmem>>, vector<32x32xf32>
    %cst = arith.constant dense<0.000000e+00> : vector<2x32xf32>
    %2 = tpu.matmul %0, %1, %cst {dimension_numbers = #tpu.dot_dimension_numbers<[1], [1], [0], [0], [0, 0, 1, 0], [], []>} : vector<2x32xf32>, vector<32x32xf32>, vector<2x32xf32> -> vector<2x32xf32>
    %c0_3 = arith.constant 0 : index
    %c0_4 = arith.constant 0 : index
    %3 = vector.load %arg2[%c0_3, %c0_4] : memref<1x32xf32, #tpu.memory_space<vmem>>, vector<1x32xf32>
    %4 = vector.broadcast %3 : vector<1x32xf32> to vector<2x32xf32>
    %5 = arith.addf %2, %4 : vector<2x32xf32>
    %c0_5 = arith.constant 0 : index
    %c0_6 = arith.constant 0 : index
    %6 = vector.load %arg3[%c0_5, %c0_6] : memref<16x32xf32, #tpu.memory_space<vmem>>, vector<16x32xf32>
    %cst_7 = arith.constant dense<0.000000e+00> : vector<2x16xf32>
    %7 = tpu.matmul %5, %6, %cst_7 {dimension_numbers = #tpu.dot_dimension_numbers<[1], [1], [0], [0], [0, 0, 1, 0], [], []>} : vector<2x32xf32>, vector<16x32xf32>, vector<2x16xf32> -> vector<2x16xf32>
    %c0_8 = arith.constant 0 : index
    %c0_9 = arith.constant 0 : index
    %8 = vector.load %arg4[%c0_8, %c0_9] : memref<1x16xf32, #tpu.memory_space<vmem>>, vector<1x16xf32>
    %9 = vector.broadcast %8 : vector<1x16xf32> to vector<2x16xf32>
    %10 = arith.addf %7, %9 : vector<2x16xf32>
    %c0_10 = arith.constant 0 : index
    %c0_11 = arith.constant 0 : index
    %c0_12 = arith.constant 0 : index
    %11 = vector.load %arg5[%c0_10, %c0_11, %c0_12] : memref<2x128x16xf32, #tpu.memory_space<vmem>>, vector<1x128x16xf32>
    %12 = vector.shape_cast %11 : vector<1x128x16xf32> to vector<128x16xf32>
    %cst_13 = arith.constant dense<0.000000e+00> : vector<2x128xf32>
    %13 = tpu.matmul %10, %12, %cst_13 {dimension_numbers = #tpu.dot_dimension_numbers<[1], [1], [0], [0], [0, 0, 1, 0], [], []>} : vector<2x16xf32>, vector<128x16xf32>, vector<2x128xf32> -> vector<2x128xf32>
    %c0_14 = arith.constant 0 : index
    %c0_15 = arith.constant 0 : index
    %c0_16 = arith.constant 0 : index
    %14 = vector.load %arg6[%c0_14, %c0_15, %c0_16] : memref<2x2x128xf32, #tpu.memory_space<vmem>>, vector<1x2x128xf32>
    %15 = vector.shape_cast %14 : vector<1x2x128xf32> to vector<2x128xf32>
    %16 = vector.shape_cast %13 : vector<2x128xf32> to vector<1x2x128xf32>
    tpu.vector_store %arg6[%c0_14, %c0_15, %c0_16], %16 {strides = array<i32>} : memref<2x2x128xf32, #tpu.memory_space<vmem>>, vector<1x2x128xf32>,
    %c1 = arith.constant 1 : index
    %c0_17 = arith.constant 0 : index
    %c0_18 = arith.constant 0 : index
    %17 = vector.load %arg5[%c1, %c0_17, %c0_18] : memref<2x128x16xf32, #tpu.memory_space<vmem>>, vector<1x128x16xf32>
    %18 = vector.shape_cast %17 : vector<1x128x16xf32> to vector<128x16xf32>
    %cst_19 = arith.constant dense<0.000000e+00> : vector<2x128xf32>
    %19 = tpu.matmul %10, %18, %cst_19 {dimension_numbers = #tpu.dot_dimension_numbers<[1], [1], [0], [0], [0, 0, 1, 0], [], []>} : vector<2x16xf32>, vector<128x16xf32>, vector<2x128xf32> -> vector<2x128xf32>
    %c1_20 = arith.constant 1 : index
    %c0_21 = arith.constant 0 : index
    %c0_22 = arith.constant 0 : index
    %20 = vector.load %arg6[%c1_20, %c0_21, %c0_22] : memref<2x2x128xf32, #tpu.memory_space<vmem>>, vector<1x2x128xf32>
    %21 = vector.shape_cast %20 : vector<1x2x128xf32> to vector<2x128xf32>
    %22 = vector.shape_cast %19 : vector<2x128xf32> to vector<1x2x128xf32>
    tpu.vector_store %arg6[%c1_20, %c0_21, %c0_22], %22 {strides = array<i32>} : memref<2x2x128xf32, #tpu.memory_space<vmem>>, vector<1x2x128xf32>,
    return
  }
}

</mosaic_0001>

<llo_original>
// kernel: tpu_custom_call.1
$region0: #{tpu_custom_call.1}
  #allocation0 [shape = 'u32[]', space=smem, size = 0x4, offset = 0x4, fixed_abs, tag = 'smem constant byte address 0x4 - core index']
  #allocation1 [shape = 'u32[144,128]{1,0:T(1,128)}', space=vmem, size = 0x12000, scoped, tag = 'internal scratch']
  %s0 = inlined_call_operand.vmem [shape: f32[2,32], index: 0, kind: input, shape index: {}]
  %s1 = inlined_call_operand.vmem [shape: f32[32,32], index: 1, kind: input, shape index: {}]
  %s2 = inlined_call_operand.vmem [shape: f32[1,32], index: 2, kind: input, shape index: {}]
  %s3 = inlined_call_operand.vmem [shape: f32[16,32], index: 3, kind: input, shape index: {}]
  %s4 = inlined_call_operand.vmem [shape: f32[1,16], index: 4, kind: input, shape index: {}]
  %s5 = inlined_call_operand.vmem [shape: f32[2,128,16], index: 5, kind: input, shape index: {}]
  %s6 = inlined_call_operand.hbm [shape: f32[2,2,128], index: 6, kind: output, shape index: {}]
  %s7 = sld [smem:[#allocation0]]
  $region34: #{tpu_custom_call.1} parent=0
    _
  %s9 = ssub.s32 1, %s7
  %s10 = scalar_select 0, %s9, %s7
  $region1: #{tpu_custom_call.1} parent=0
    #allocation2 [shape = 'u8[2048]{0}', space=vmem, size = 0x800, scoped, tag = 'output window, operand 0, single buffered']
    #allocation3 [shape = 's32[1]{0}', space=sflag, size = 0x4, scoped, tag = 'scoped memory for tpu_custom_call.1']
    %11 = vsyncpa [#allocation3], 0
    // Predicated region
    $region2: #{tpu_custom_call.1} parent=1 // pred_check
      _
    $region3: #{tpu_custom_call.1} parent=1 // pred_check_branch
      %13 = sbr.rel (0) target = $region5
    $region4: #{tpu_custom_call.1} parent=1 // pred_region
      _
    $region5: #{tpu_custom_call.1} parent=1 // pred_fallthru
      _
    // Predicated region
    $region6: #{tpu_custom_call.1} parent=1 // pred_check
      _
    $region7: #{tpu_custom_call.1} parent=1 // pred_check_branch
      %15 = sbr.rel (0) target = $region9
    $region8: #{tpu_custom_call.1} parent=1 // pred_region
      _
    $region9: #{tpu_custom_call.1} parent=1 // pred_fallthru
      _
    // Predicated region
    $region10: #{tpu_custom_call.1} parent=1 // pred_check
      _
    $region11: #{tpu_custom_call.1} parent=1 // pred_check_branch
      %17 = sbr.rel (0) target = $region13
    $region12: #{tpu_custom_call.1} parent=1 // pred_region
      _
    $region13: #{tpu_custom_call.1} parent=1 // pred_fallthru
      _
    // Predicated region
    $region14: #{tpu_custom_call.1} parent=1 // pred_check
      _
    $region15: #{tpu_custom_call.1} parent=1 // pred_check_branch
      %19 = sbr.rel (0) target = $region17
    $region16: #{tpu_custom_call.1} parent=1 // pred_region
      _
    $region17: #{tpu_custom_call.1} parent=1 // pred_fallthru
      _
    // Predicated region
    $region18: #{tpu_custom_call.1} parent=1 // pred_check
      _
    $region19: #{tpu_custom_call.1} parent=1 // pred_check_branch
      %21 = sbr.rel (0) target = $region21
    $region20: #{tpu_custom_call.1} parent=1 // pred_region
      _
    $region21: #{tpu_custom_call.1} parent=1 // pred_fallthru
      _
    // Predicated region
    $region22: #{tpu_custom_call.1} parent=1 // pred_check
      _
    $region23: #{tpu_custom_call.1} parent=1 // pred_check_branch
      %23 = sbr.rel (0) target = $region25
    $region24: #{tpu_custom_call.1} parent=1 // pred_region
      _
    $region25: #{tpu_custom_call.1} parent=1 // pred_fallthru
      _
    %v24 = vld [vmem:[%s0] sm:$0x3]
    %v25 = vld [vmem:[%s1] sm:$0xff]
    %v26 = vld [vmem:[%s1 + $0x8] sm:$0xff]
    %v27 = vld [vmem:[%s1 + $0x10] sm:$0xff]
    %v28 = vld [vmem:[%s1 + $0x18] sm:$0xff]
    %v29 = vld [vmem:[%s2] sm:$0x1]
    %v31 = vlaneseq
    %v32 = vshrl.u32 %v31, 7
    %v33 = vsub.s32 0, %v32
    %v34 = vrot.slane %v29, %v33
    %vm36 = vcmask 261120
    %v38 = vsel %vm36, %v24, 0
    %v41 = vsel %vm36, %v25, 0
    %v44 = vsel %vm36, %v26, 0
    %v47 = vsel %vm36, %v27, 0
    %v50 = vsel %vm36, %v28, 0
    %52 = vmatprep.subr.mxu0 0.0
    %53 = vmatpush1.xpose.msra.mxu0 %v41
    %54 = vmatprep.subr.mxu0 0.0
    %55 = vmatpush1.xpose.msra.mxu0 %v44
    %56 = vmatprep.subr.mxu0 0.0
    %57 = vmatpush1.xpose.msra.mxu0 %v47
    %58 = vmatprep.subr.mxu0 0.0
    %59 = vmatpush1.xpose.msra.mxu0 %v50
    %60 = vmatprep.subr.mxu0 0.0
    %61 = vmatpush1.xpose.msra.mxu0 0.0
    %62 = vmatprep.subr.mxu0 0.0
    %63 = vmatpush1.xpose.msra.mxu0 0.0
    %64 = vmatprep.subr.mxu0 0.0
    %65 = vmatpush1.xpose.msra.mxu0 0.0
    %66 = vmatprep.subr.mxu0 0.0
    %67 = vmatpush1.xpose.msra.mxu0 0.0
    %68 = vmatprep.subr.mxu0 0.0
    %69 = vmatpush1.xpose.msra.mxu0 0.0
    %70 = vmatprep.subr.mxu0 0.0
    %71 = vmatpush1.xpose.msra.mxu0 0.0
    %72 = vmatprep.subr.mxu0 0.0
    %73 = vmatpush1.xpose.msra.mxu0 0.0
    %74 = vmatprep.subr.mxu0 0.0
    %75 = vmatpush1.xpose.msra.mxu0 0.0
    %76 = vmatprep.subr.mxu0 0.0
    %77 = vmatpush1.xpose.msra.mxu0 0.0
    %78 = vmatprep.subr.mxu0 0.0
    %79 = vmatpush1.xpose.msra.mxu0 0.0
    %80 = vmatprep.subr.mxu0 0.0
    %81 = vmatpush1.xpose.msra.mxu0 0.0
    %82 = vmatprep.subr.mxu0 0.0
    %83 = vmatpush1.xpose.msra.mxu0 0.0
    %84 = vmatprep.subr.mxu0 0.0
    %85 = vmatpush1.xpose.msra.mxu0 0.0
    %86 = vmatprep.subr.mxu0 0.0
    %87 = vmatpush1.xpose.msra.mxu0 0.0
    %88 = vmatprep.subr.mxu0 0.0
    %89 = vmatpush1.xpose.msra.mxu0 0.0
    %90 = vmatprep.subr.mxu0 0.0
    %91 = vmatpush1.xpose.msra.mxu0 0.0
    %92 = vmatprep.subr.mxu0 0.0
    %93 = vmatpush1.xpose.msra.mxu0 0.0
    %94 = vmatprep.subr.mxu0 0.0
    %95 = vmatpush1.xpose.msra.mxu0 0.0
    %96 = vmatprep.subr.mxu0 0.0
    %97 = vmatpush1.xpose.msra.mxu0 0.0
    %98 = vmatprep.subr.mxu0 0.0
    %99 = vmatpush1.xpose.msra.mxu0 0.0
    %100 = vmatprep.subr.mxu0 0.0
    %101 = vmatpush1.xpose.msra.mxu0 0.0
    %102 = vmatprep.subr.mxu0 0.0
    %103 = vmatpush1.xpose.msra.mxu0 0.0
    %104 = vmatprep.subr.mxu0 0.0
    %105 = vmatpush1.xpose.msra.mxu0 0.0
    %106 = vmatprep.subr.mxu0 0.0
    %107 = vmatpush1.xpose.msra.mxu0 0.0
    %108 = vmatprep.subr.mxu0 0.0
    %109 = vmatpush1.xpose.msra.mxu0 0.0
    %110 = vmatprep.subr.mxu0 0.0
    %111 = vmatpush1.xpose.msra.mxu0 0.0
    %112 = vmatprep.subr.mxu0 0.0
    %113 = vmatpush1.xpose.msra.mxu0 0.0
    %114 = vmatprep.subr.mxu0 0.0
    %115 = vmatpush1.xpose.msra.mxu0 0.0
    %116 = vmatprep.mubr.f32.mxu0 0.0
    %117 = vmatmul.mubr.f32.gmra.mrb[0].mxu0 %v38
    %v118 = vpop.f32.mrb[0].mxu0
    %v119 = vadd.f32 %v34, %v118
    %v120 = vpop.f32.mrb[0].mxu0
    %121 = vdwg.mxu0
    %v122 = vld [vmem:[%s3] sm:$0xff]
    %v123 = vld [vmem:[%s3 + $0x8] sm:$0xff]
    %v124 = vld [vmem:[%s4] sm:$0x1]
    %v126 = vlaneseq
    %v127 = vshrl.u32 %v126, 7
    %v128 = vsub.s32 0, %v127
    %v129 = vrot.slane %v124, %v128
    %v132 = vsel %vm36, %v119, 0
    %v135 = vsel %vm36, %v122, 0
    %v138 = vsel %vm36, %v123, 0
    %140 = vmatprep.subr.mxu0 0.0
    %141 = vmatpush1.xpose.msra.mxu0 %v135
    %142 = vmatprep.subr.mxu0 0.0
    %143 = vmatpush1.xpose.msra.mxu0 %v138
    %144 = vmatprep.subr.mxu0 0.0
    %145 = vmatpush1.xpose.msra.mxu0 0.0
    %146 = vmatprep.subr.mxu0 0.0
    %147 = vmatpush1.xpose.msra.mxu0 0.0
    %148 = vmatprep.subr.mxu0 0.0
    %149 = vmatpush1.xpose.msra.mxu0 0.0
    %150 = vmatprep.subr.mxu0 0.0
    %151 = vmatpush1.xpose.msra.mxu0 0.0
    %152 = vmatprep.subr.mxu0 0.0
    %153 = vmatpush1.xpose.msra.mxu0 0.0
    %154 = vmatprep.subr.mxu0 0.0
    %155 = vmatpush1.xpose.msra.mxu0 0.0
    %156 = vmatprep.subr.mxu0 0.0
    %157 = vmatpush1.xpose.msra.mxu0 0.0
    %158 = vmatprep.subr.mxu0 0.0
    %159 = vmatpush1.xpose.msra.mxu0 0.0
    %160 = vmatprep.subr.mxu0 0.0
    %161 = vmatpush1.xpose.msra.mxu0 0.0
    %162 = vmatprep.subr.mxu0 0.0
    %163 = vmatpush1.xpose.msra.mxu0 0.0
    %164 = vmatprep.subr.mxu0 0.0
    %165 = vmatpush1.xpose.msra.mxu0 0.0
    %166 = vmatprep.subr.mxu0 0.0
    %167 = vmatpush1.xpose.msra.mxu0 0.0
    %168 = vmatprep.subr.mxu0 0.0
    %169 = vmatpush1.xpose.msra.mxu0 0.0
    %170 = vmatprep.subr.mxu0 0.0
    %171 = vmatpush1.xpose.msra.mxu0 0.0
    %172 = vmatprep.subr.mxu0 0.0
    %173 = vmatpush1.xpose.msra.mxu0 0.0
    %174 = vmatprep.subr.mxu0 0.0
    %175 = vmatpush1.xpose.msra.mxu0 0.0
    %176 = vmatprep.subr.mxu0 0.0
    %177 = vmatpush1.xpose.msra.mxu0 0.0
    %178 = vmatprep.subr.mxu0 0.0
    %179 = vmatpush1.xpose.msra.mxu0 0.0
    %180 = vmatprep.subr.mxu0 0.0
    %181 = vmatpush1.xpose.msra.mxu0 0.0
    %182 = vmatprep.subr.mxu0 0.0
    %183 = vmatpush1.xpose.msra.mxu0 0.0
    %184 = vmatprep.subr.mxu0 0.0
    %185 = vmatpush1.xpose.msra.mxu0 0.0
    %186 = vmatprep.subr.mxu0 0.0
    %187 = vmatpush1.xpose.msra.mxu0 0.0
    %188 = vmatprep.subr.mxu0 0.0
    %189 = vmatpush1.xpose.msra.mxu0 0.0
    %190 = vmatprep.subr.mxu0 0.0
    %191 = vmatpush1.xpose.msra.mxu0 0.0
    %192 = vmatprep.subr.mxu0 0.0
    %193 = vmatpush1.xpose.msra.mxu0 0.0
    %194 = vmatprep.subr.mxu0 0.0
    %195 = vmatpush1.xpose.msra.mxu0 0.0
    %196 = vmatprep.subr.mxu0 0.0
    %197 = vmatpush1.xpose.msra.mxu0 0.0
    %198 = vmatprep.subr.mxu0 0.0
    %199 = vmatpush1.xpose.msra.mxu0 0.0
    %200 = vmatprep.subr.mxu0 0.0
    %201 = vmatpush1.xpose.msra.mxu0 0.0
    %202 = vmatprep.subr.mxu0 0.0
    %203 = vmatpush1.xpose.msra.mxu0 0.0
    %204 = vmatprep.mubr.f32.mxu0 0.0
    %205 = vmatmul.mubr.f32.gmra.mrb[0].mxu0 %v132
    %v206 = vpop.f32.mrb[0].mxu0
    %v207 = vadd.f32 %v129, %v206
    %v208 = vpop.f32.mrb[0].mxu0
    %209 = vdwg.mxu0
    %v210 = vld [vmem:[%s5] sm:$0xff]
    %v211 = vld [vmem:[%s5 + $0x8] sm:$0xff]
    %v212 = vld [vmem:[%s5 + $0x10] sm:$0xff]
    %v213 = vld [vmem:[%s5 + $0x18] sm:$0xff]
    %v214 = vld [vmem:[%s5 + $0x20] sm:$0xff]
    %v215 = vld [vmem:[%s5 + $0x28] sm:$0xff]
    %v216 = vld [vmem:[%s5 + $0x30] sm:$0xff]
    %v217 = vld [vmem:[%s5 + $0x38] sm:$0xff]
    %v218 = vld [vmem:[%s5 + $0x40] sm:$0xff]
    %v219 = vld [vmem:[%s5 + $0x48] sm:$0xff]
    %v220 = vld [vmem:[%s5 + $0x50] sm:$0xff]
    %v221 = vld [vmem:[%s5 + $0x58] sm:$0xff]
    %v222 = vld [vmem:[%s5 + $0x60] sm:$0xff]
    %v223 = vld [vmem:[%s5 + $0x68] sm:$0xff]
    %v224 = vld [vmem:[%s5 + $0x70] sm:$0xff]
    %v225 = vld [vmem:[%s5 + $0x78] sm:$0xff]
    %vm226 = vcmask 130048
    %v228 = vsel %vm226, %v207, 0
    %v231 = vsel %vm226, %v210, 0
    %v234 = vsel %vm226, %v211, 0
    %v237 = vsel %vm226, %v212, 0
    %v240 = vsel %vm226, %v213, 0
    %v243 = vsel %vm226, %v214, 0
    %v246 = vsel %vm226, %v215, 0
    %v249 = vsel %vm226, %v216, 0
    %v252 = vsel %vm226, %v217, 0
    %v255 = vsel %vm226, %v218, 0
    %v258 = vsel %vm226, %v219, 0
    %v261 = vsel %vm226, %v220, 0
    %v264 = vsel %vm226, %v221, 0
    %v267 = vsel %vm226, %v222, 0
    %v270 = vsel %vm226, %v223, 0
    %v273 = vsel %vm226, %v224, 0
    %v276 = vsel %vm226, %v225, 0
    %278 = vmatprep.subr.mxu0 0.0
    %279 = vmatpush1.xpose.msra.mxu0 %v231
    %280 = vmatprep.subr.mxu0 0.0
    %281 = vmatpush1.xpose.msra.mxu0 %v234
    %282 = vmatprep.subr.mxu0 0.0
    %283 = vmatpush1.xpose.msra.mxu0 %v237
    %284 = vmatprep.subr.mxu0 0.0
    %285 = vmatpush1.xpose.msra.mxu0 %v240
    %286 = vmatprep.subr.mxu0 0.0
    %287 = vmatpush1.xpose.msra.mxu0 %v243
    %288 = vmatprep.subr.mxu0 0.0
    %289 = vmatpush1.xpose.msra.mxu0 %v246
    %290 = vmatprep.subr.mxu0 0.0
    %291 = vmatpush1.xpose.msra.mxu0 %v249
    %292 = vmatprep.subr.mxu0 0.0
    %293 = vmatpush1.xpose.msra.mxu0 %v252
    %294 = vmatprep.subr.mxu0 0.0
    %295 = vmatpush1.xpose.msra.mxu0 %v255
    %296 = vmatprep.subr.mxu0 0.0
    %297 = vmatpush1.xpose.msra.mxu0 %v258
    %298 = vmatprep.subr.mxu0 0.0
    %299 = vmatpush1.xpose.msra.mxu0 %v261
    %300 = vmatprep.subr.mxu0 0.0
    %301 = vmatpush1.xpose.msra.mxu0 %v264
    %302 = vmatprep.subr.mxu0 0.0
    %303 = vmatpush1.xpose.msra.mxu0 %v267
    %304 = vmatprep.subr.mxu0 0.0
    %305 = vmatpush1.xpose.msra.mxu0 %v270
    %306 = vmatprep.subr.mxu0 0.0
    %307 = vmatpush1.xpose.msra.mxu0 %v273
    %308 = vmatprep.subr.mxu0 0.0
    %309 = vmatpush1.xpose.msra.mxu0 %v276
    %310 = vmatprep.subr.mxu0 0.0
    %311 = vmatpush1.xpose.msra.mxu0 0.0
    %312 = vmatprep.subr.mxu0 0.0
    %313 = vmatpush1.xpose.msra.mxu0 0.0
    %314 = vmatprep.subr.mxu0 0.0
    %315 = vmatpush1.xpose.msra.mxu0 0.0
    %316 = vmatprep.subr.mxu0 0.0
    %317 = vmatpush1.xpose.msra.mxu0 0.0
    %318 = vmatprep.subr.mxu0 0.0
    %319 = vmatpush1.xpose.msra.mxu0 0.0
    %320 = vmatprep.subr.mxu0 0.0
    %321 = vmatpush1.xpose.msra.mxu0 0.0
    %322 = vmatprep.subr.mxu0 0.0
    %323 = vmatpush1.xpose.msra.mxu0 0.0
    %324 = vmatprep.subr.mxu0 0.0
    %325 = vmatpush1.xpose.msra.mxu0 0.0
    %326 = vmatprep.subr.mxu0 0.0
    %327 = vmatpush1.xpose.msra.mxu0 0.0
    %328 = vmatprep.subr.mxu0 0.0
    %329 = vmatpush1.xpose.msra.mxu0 0.0
    %330 = vmatprep.subr.mxu0 0.0
    %331 = vmatpush1.xpose.msra.mxu0 0.0
    %332 = vmatprep.subr.mxu0 0.0
    %333 = vmatpush1.xpose.msra.mxu0 0.0
    %334 = vmatprep.subr.mxu0 0.0
    %335 = vmatpush1.xpose.msra.mxu0 0.0
    %336 = vmatprep.subr.mxu0 0.0
    %337 = vmatpush1.xpose.msra.mxu0 0.0
    %338 = vmatprep.subr.mxu0 0.0
    %339 = vmatpush1.xpose.msra.mxu0 0.0
    %340 = vmatprep.subr.mxu0 0.0
    %341 = vmatpush1.xpose.msra.mxu0 0.0
    %342 = vmatprep.mubr.f32.mxu0 0.0
    %343 = vmatmul.mubr.f32.gmra.mrb[0].mxu0 %v228
    %v344 = vpop.f32.mrb[0].mxu0
    %v345 = vadd.f32 0.0, %v344
    %v346 = vpop.f32.mrb[0].mxu0
    %347 = vdwg.mxu0
    %348 = vst [vmem:[#allocation2] sm:$0x3] %v345
    %s349 = scalar_lea.vmem %s5, 128
    %v350 = vld [vmem:[%s349] sm:$0xff]
    %v351 = vld [vmem:[%s349 + $0x8] sm:$0xff]
    %v352 = vld [vmem:[%s349 + $0x10] sm:$0xff]
    %v353 = vld [vmem:[%s349 + $0x18] sm:$0xff]
    %v354 = vld [vmem:[%s349 + $0x20] sm:$0xff]
    %v355 = vld [vmem:[%s349 + $0x28] sm:$0xff]
    %v356 = vld [vmem:[%s349 + $0x30] sm:$0xff]
    %v357 = vld [vmem:[%s349 + $0x38] sm:$0xff]
    %v358 = vld [vmem:[%s349 + $0x40] sm:$0xff]
    %v359 = vld [vmem:[%s349 + $0x48] sm:$0xff]
    %v360 = vld [vmem:[%s349 + $0x50] sm:$0xff]
    %v361 = vld [vmem:[%s349 + $0x58] sm:$0xff]
    %v362 = vld [vmem:[%s349 + $0x60] sm:$0xff]
    %v363 = vld [vmem:[%s349 + $0x68] sm:$0xff]
    %v364 = vld [vmem:[%s349 + $0x70] sm:$0xff]
    %v365 = vld [vmem:[%s349 + $0x78] sm:$0xff]
    %v367 = vsel %vm226, %v350, 0
    %v370 = vsel %vm226, %v351, 0
    %v373 = vsel %vm226, %v352, 0
    %v376 = vsel %vm226, %v353, 0
    %v379 = vsel %vm226, %v354, 0
    %v382 = vsel %vm226, %v355, 0
    %v385 = vsel %vm226, %v356, 0
    %v388 = vsel %vm226, %v357, 0
    %v391 = vsel %vm226, %v358, 0
    %v394 = vsel %vm226, %v359, 0
    %v397 = vsel %vm226, %v360, 0
    %v400 = vsel %vm226, %v361, 0
    %v403 = vsel %vm226, %v362, 0
    %v406 = vsel %vm226, %v363, 0
    %v409 = vsel %vm226, %v364, 0
    %v412 = vsel %vm226, %v365, 0
    %414 = vmatprep.subr.mxu0 0.0
    %415 = vmatpush1.xpose.msra.mxu0 %v367
    %416 = vmatprep.subr.mxu0 0.0
    %417 = vmatpush1.xpose.msra.mxu0 %v370
    %418 = vmatprep.subr.mxu0 0.0
    %419 = vmatpush1.xpose.msra.mxu0 %v373
    %420 = vmatprep.subr.mxu0 0.0
    %421 = vmatpush1.xpose.msra.mxu0 %v376
    %422 = vmatprep.subr.mxu0 0.0
    %423 = vmatpush1.xpose.msra.mxu0 %v379
    %424 = vmatprep.subr.mxu0 0.0
    %425 = vmatpush1.xpose.msra.mxu0 %v382
    %426 = vmatprep.subr.mxu0 0.0
    %427 = vmatpush1.xpose.msra.mxu0 %v385
    %428 = vmatprep.subr.mxu0 0.0
    %429 = vmatpush1.xpose.msra.mxu0 %v388
    %430 = vmatprep.subr.mxu0 0.0
    %431 = vmatpush1.xpose.msra.mxu0 %v391
    %432 = vmatprep.subr.mxu0 0.0
    %433 = vmatpush1.xpose.msra.mxu0 %v394
    %434 = vmatprep.subr.mxu0 0.0
    %435 = vmatpush1.xpose.msra.mxu0 %v397
    %436 = vmatprep.subr.mxu0 0.0
    %437 = vmatpush1.xpose.msra.mxu0 %v400
    %438 = vmatprep.subr.mxu0 0.0
    %439 = vmatpush1.xpose.msra.mxu0 %v403
    %440 = vmatprep.subr.mxu0 0.0
    %441 = vmatpush1.xpose.msra.mxu0 %v406
    %442 = vmatprep.subr.mxu0 0.0
    %443 = vmatpush1.xpose.msra.mxu0 %v409
    %444 = vmatprep.subr.mxu0 0.0
    %445 = vmatpush1.xpose.msra.mxu0 %v412
    %446 = vmatprep.subr.mxu0 0.0
    %447 = vmatpush1.xpose.msra.mxu0 0.0
    %448 = vmatprep.subr.mxu0 0.0
    %449 = vmatpush1.xpose.msra.mxu0 0.0
    %450 = vmatprep.subr.mxu0 0.0
    %451 = vmatpush1.xpose.msra.mxu0 0.0
    %452 = vmatprep.subr.mxu0 0.0
    %453 = vmatpush1.xpose.msra.mxu0 0.0
    %454 = vmatprep.subr.mxu0 0.0
    %455 = vmatpush1.xpose.msra.mxu0 0.0
    %456 = vmatprep.subr.mxu0 0.0
    %457 = vmatpush1.xpose.msra.mxu0 0.0
    %458 = vmatprep.subr.mxu0 0.0
    %459 = vmatpush1.xpose.msra.mxu0 0.0
    %460 = vmatprep.subr.mxu0 0.0
    %461 = vmatpush1.xpose.msra.mxu0 0.0
    %462 = vmatprep.subr.mxu0 0.0
    %463 = vmatpush1.xpose.msra.mxu0 0.0
    %464 = vmatprep.subr.mxu0 0.0
    %465 = vmatpush1.xpose.msra.mxu0 0.0
    %466 = vmatprep.subr.mxu0 0.0
    %467 = vmatpush1.xpose.msra.mxu0 0.0
    %468 = vmatprep.subr.mxu0 0.0
    %469 = vmatpush1.xpose.msra.mxu0 0.0
    %470 = vmatprep.subr.mxu0 0.0
    %471 = vmatpush1.xpose.msra.mxu0 0.0
    %472 = vmatprep.subr.mxu0 0.0
    %473 = vmatpush1.xpose.msra.mxu0 0.0
    %474 = vmatprep.subr.mxu0 0.0
    %475 = vmatpush1.xpose.msra.mxu0 0.0
    %476 = vmatprep.subr.mxu0 0.0
    %477 = vmatpush1.xpose.msra.mxu0 0.0
    %478 = vmatprep.mubr.f32.mxu0 0.0
    %479 = vmatmul.mubr.f32.gmra.mrb[0].mxu0 %v228
    %v480 = vpop.f32.mrb[0].mxu0
    %v481 = vadd.f32 0.0, %v480
    %v482 = vpop.f32.mrb[0].mxu0
    %483 = vdwg.mxu0
    %s484 = scalar_lea.vmem [#allocation2], 2
    %485 = vst [vmem:[%s484] sm:$0x3] %v481
    // Predicated region
    $region26: #{tpu_custom_call.1} parent=1 // pred_check
      _
    $region27: #{tpu_custom_call.1} parent=1 // pred_check_branch
      %487 = sbr.rel (0) target = $region29
    $region28: #{tpu_custom_call.1} parent=1 // pred_region
      %s489 = ssub.s32 64, 64
      %490 = vsyncadd [#allocation3], %s489
      %s491 = sshll.u32 [#allocation2], 4
      %s492 = int_to_ptr.vmem [resolvable:$true] %s491
      %497 = dma.vmem_to_hbm [thread:$0]  %s492, 64, %s6, [#allocation3], 32, 32, 2
    $region29: #{tpu_custom_call.1} parent=1 // pred_fallthru
      _
    // Predicated region
    $region30: #{tpu_custom_call.1} parent=1 // pred_check
      _
    $region31: #{tpu_custom_call.1} parent=1 // pred_check_branch
      %499 = sbr.rel (0) target = $region33
    $region32: #{tpu_custom_call.1} parent=1 // pred_region
      %500 = dma.done [#allocation3], 64
    $region33: #{tpu_custom_call.1} parent=1 // pred_fallthru
      _
    %501 = vsyncpa [#allocation3], 1

</llo_original>
